<compile_context>
chip_gen: v7x
topology: tpu7x:2x2x1
jax: 0.10.0
libtpu: 0.0.40
codegen_flags: <defaults>
</compile_context>

<pallas_src>
import functools

import jax
import jax.numpy as jnp
from jax.experimental import pallas as pl
from jax.experimental.pallas import tpu as pltpu


def _round_up(x, m):
    return (x + m - 1) // m * m


def _cdiv(a, b):
    return -(-a // b)


# --------------------------------------------------------------------------
# Per-chip hardware query (done once at import; safe fallbacks).
# --------------------------------------------------------------------------
def _tpu_vmem_and_cores():
    try:
        info = pltpu.get_tpu_info()
        cap = int(info.vmem_capacity_bytes)
    except Exception:
        return 64 * 1024 * 1024, 1          # conservative fallback
    cores = 0
    for attr in ("num_cores", "core_count", "num_tensorcores", "tensorcore_count"):
        try:
            cores = int(getattr(info, attr, 0) or 0)
        except Exception:
            cores = 0
        if cores:
            break
    if cores <= 0:
        # Heuristic: v7x exposes 64 MiB VMEM per TensorCore and has 2 TCs/chip.
        cores = 2 if cap <= 64 * 1024 * 1024 else 1
    return cap, cores


_VMEM_CAP, _NUM_TC = _tpu_vmem_and_cores()
_VMEM_BUDGET = int(_VMEM_CAP * 0.75)   # tile-footprint budget (headroom for compiler scratch)
_VMEM_LIMIT = int(_VMEM_CAP * 0.85)    # scoped-VMEM compile limit


# --------------------------------------------------------------------------
# Kernel
# --------------------------------------------------------------------------
def _ffn_kernel(x_ref, w1_ref, b1_ref, w2_ref, b2_ref, o_ref, *scratch,
                gelu, approx_gelu):
    """One (tm, d_in) token tile x one tk-wide chunk of the hidden dim.

    Grid = (rows, hidden-chunks); the hidden axis is last ("arbitrary"), the
    output BlockSpec ignores it, so the accumulator stays resident across it.
    If no scratch ref is passed (f32 output) we accumulate directly in o_ref.
    """
    acc_ref = scratch[0] if scratch else o_ref
    k = pl.program_id(1)

    # Fold the output bias into the accumulator init (first hidden chunk).
    @pl.when(k == 0)
    def _():
        acc_ref[...] = jnp.broadcast_to(
            b2_ref[...].astype(jnp.float32), acc_ref.shape)

    # linear1 chunk: (tm, d_in) @ (d_in, tk) -> (tm, tk), f32 accumulate (MXU).
    # Cast x to the weight dtype (no-op for f32; native bf16 MXU for bf16).
    x = x_ref[...].astype(w1_ref.dtype)
    h = jnp.dot(x, w1_ref[...], preferred_element_type=jnp.float32)
    h = h + b1_ref[...].astype(jnp.float32)

    if gelu:
        if approx_gelu:
            # tanh approximation (rides the EUP slot); opt-in, slight numerics
            # deviation from PyTorch's exact-erf default.
            h = 0.5 * h * (1.0 + jnp.tanh(
                0.7978845608028654 * (h + 0.044715 * h * h * h)))
        else:
            # Exact erf GELU (PyTorch nn.GELU default), f32 math.
            h = 0.5 * h * (1.0 + jax.lax.erf(h * 0.7071067811865476))
    else:
        h = jnp.maximum(h, 0.0)

    # linear2 chunk: (tm, tk) @ (tk, d_in), accumulated in f32.  The activation
    # is deliberately cast to the weight dtype (bf16 when weights are bf16).
    acc_ref[...] += jnp.dot(h.astype(w2_ref.dtype), w2_ref[...],
                            preferred_element_type=jnp.float32)

    if scratch:
        @pl.when(k == pl.num_programs(1) - 1)
        def _():
            o_ref[...] = acc_ref[...].astype(o_ref.dtype)


# --------------------------------------------------------------------------
# One-time parameter prep (do this at load time, NOT per forward call)
# --------------------------------------------------------------------------
def prepare_ffn_params(w1, b1, w2, b2, *, weights_dtype=None):
    """Transpose nn.Linear weights to row-major matmul layout, pad feature dims
    to multiples of 128 (lane-dense), and optionally cast weights to bf16.
    Zero-padding is exact: GELU(0)=0 and padded W2 rows/cols contribute 0.
    Biases are kept in f32 (they only enter f32 accumulators).

    w1: (inner_dim, input_dim), b1: (inner_dim,)
    w2: (input_dim, inner_dim), b2: (input_dim,)
    """
    inner_dim, input_dim = w1.shape
    wdt = weights_dtype if weights_dtype is not None else w1.dtype
    d_in_pad = _round_up(input_dim, 128)
    inner_pad = _round_up(inner_dim, 128)

    w1_t = jnp.zeros((d_in_pad, inner_pad), wdt)
    w1_t = w1_t.at[:input_dim, :inner_dim].set(w1.T.astype(wdt))
    b1_p = jnp.zeros((1, inner_pad), jnp.float32)
    b1_p = b1_p.at[0, :inner_dim].set(b1.astype(jnp.float32))
    w2_t = jnp.zeros((inner_pad, d_in_pad), wdt)
    w2_t = w2_t.at[:inner_dim, :input_dim].set(w2.T.astype(wdt))
    b2_p = jnp.zeros((1, d_in_pad), jnp.float32)
    b2_p = b2_p.at[0, :input_dim].set(b2.astype(jnp.float32))

    return dict(w1_t=w1_t, b1=b1_p, w2_t=w2_t, b2=b2_p,
                input_dim=input_dim, inner_dim=inner_dim)


# --------------------------------------------------------------------------
# Static tile selection under the per-chip VMEM budget
# --------------------------------------------------------------------------
def _select_tiles(m, d_in_pad, inner_pad, x_bytes, w_bytes, out_bytes,
                  use_scratch, tm_req):
    row_align = max(8, 32 // x_bytes)        # 8 f32, 16 bf16, 32 int8

    def footprint(tm, tk):
        f = 2 * tm * d_in_pad * x_bytes                     # x tile (dbl-buffered)
        f += 2 * 2 * d_in_pad * tk * w_bytes                # W1 + W2 chunks
        f += 2 * 8 * (tk + d_in_pad) * 4                    # biases (sublane-padded)
        f += 2 * tm * d_in_pad * out_bytes                  # out tile
        if use_scratch:
            f += tm * d_in_pad * 4                          # f32 accumulator
        return f

    # Row tile: large, clamped to the (aligned) row count.
    tm = _round_up(min(tm_req, _round_up(m, row_align)), row_align)
    # Keep >= 2 row tiles when the chip has 2 TensorCores so the "parallel"
    # rows axis actually gets sharded (v7x); harmless no-op on 1-TC chips.
    if _NUM_TC >= 2 and m > row_align and _cdiv(m, tm) < 2:
        tm = max(row_align, _round_up(_cdiv(m, 2), row_align))

    nk_max = max(1, inner_pad // 128)
    while True:
        # Prefer the largest tk (fewest k steps; tk == inner_pad => weights
        # stay resident in VMEM across all row tiles, fetched from HBM once).
        for nk in range(1, nk_max + 1):
            if inner_pad % nk:
                continue
            tk = inner_pad // nk
            if tk % 128:
                continue
            if footprint(tm, tk) <= _VMEM_BUDGET:
                return tm, tk
        if tm <= row_align:
            break
        tm = max(row_align, _round_up(tm // 2, row_align))
    return row_align, 128   # best effort; vmem limit still leaves headroom


# --------------------------------------------------------------------------
# Forward pass
# --------------------------------------------------------------------------
@functools.partial(jax.jit, static_argnames=("tm", "gelu", "approx_gelu"))
def _ffn_2d(x2d, w1_t, b1, w2_t, b2, *, tm, gelu, approx_gelu):
    m, input_dim = x2d.shape
    d_in_pad, inner_pad = w1_t.shape
    out_dtype = x2d.dtype

    x_bytes = jnp.dtype(x2d.dtype).itemsize
    w_bytes = jnp.dtype(w1_t.dtype).itemsize
    out_bytes = jnp.dtype(out_dtype).itemsize
    direct_acc = jnp.dtype(out_dtype) == jnp.float32   # accumulate in o_ref

    # Column-pad x only if the feature dim is not lane-aligned (exact: padded
    # W1 rows / W2 cols are zero).  Ragged M needs no padding: Pallas partial
    # trailing row blocks mask the writeback.
    if d_in_pad != input_dim:
        x_p = jnp.zeros((m, d_in_pad), x2d.dtype).at[:, :input_dim].set(x2d)
    else:
        x_p = x2d

    tm_eff, tk = _select_tiles(m, d_in_pad, inner_pad, x_bytes, w_bytes,
                               out_bytes, not direct_acc, tm)
    grid_rows = _cdiv(m, tm_eff)
    nk = inner_pad // tk
    grid = (grid_rows, nk)

    # Cost estimate: weights are re-streamed once per row tile unless they are
    # resident (nk == 1 -> block index never changes -> fetched once).
    weight_passes = 1 if nk == 1 else grid_rows
    flops = int(4 * m * d_in_pad * inner_pad)
    bytes_accessed = int(
        m * d_in_pad * (x_bytes + out_bytes)
        + weight_passes * (w1_t.size + w2_t.size) * w_bytes
        + (b1.size + b2.size) * 4)
    transcendentals = int(m * inner_pad) if gelu else 0

    scratch_shapes = [] if direct_acc else [
        pltpu.VMEM((tm_eff, d_in_pad), jnp.float32)]

    out = pl.pallas_call(
        functools.partial(_ffn_kernel, gelu=gelu, approx_gelu=approx_gelu),
        out_shape=jax.ShapeDtypeStruct((m, d_in_pad), out_dtype),
        grid_spec=pltpu.PrefetchScalarGridSpec(
            num_scalar_prefetch=0,
            grid=grid,
            in_specs=[
                # tokens: tiled over rows, resident across hidden chunks
                pl.BlockSpec((tm_eff, d_in_pad), lambda i, k: (i, 0)),
                # W1 chunk: (d_in, tk)
                pl.BlockSpec((d_in_pad, tk), lambda i, k: (0, k)),
                # b1 chunk: (1, tk)
                pl.BlockSpec((1, tk), lambda i, k: (0, k)),
                # W2 chunk: (tk, d_in)
                pl.BlockSpec((tk, d_in_pad), lambda i, k: (k, 0)),
                # b2: grid-invariant
                pl.BlockSpec((1, d_in_pad), lambda i, k: (0, 0)),
            ],
            out_specs=pl.BlockSpec((tm_eff, d_in_pad), lambda i, k: (i, 0)),
            scratch_shapes=scratch_shapes,
        ),
        compiler_params=pltpu.CompilerParams(
            dimension_semantics=("parallel", "arbitrary"),
            vmem_limit_bytes=_VMEM_LIMIT,
        ),
        cost_estimate=pl.CostEstimate(
            flops=flops,
            bytes_accessed=bytes_accessed,
            transcendentals=transcendentals,
        ),
    )(x_p, w1_t, b1, w2_t, b2)

    if d_in_pad != input_dim:
        out = out[:, :input_dim]
    return out


def feed_forward(x, params, *, tm=512, gelu=True, approx_gelu=False):
    """x: (..., input_dim) -> (..., input_dim). `params` from prepare_ffn_params."""
    input_dim = params["input_dim"]
    assert x.shape[-1] == input_dim
    orig_shape = x.shape
    x2d = x.reshape(-1, input_dim)
    out2d = _ffn_2d(x2d, params["w1_t"], params["b1"], params["w2_t"],
                    params["b2"], tm=tm, gelu=gelu, approx_gelu=approx_gelu)
    return out2d.reshape(orig_shape)


# --------------------------------------------------------------------------
# Pure-JAX reference (matches the PyTorch module)
# --------------------------------------------------------------------------
def feed_forward_ref(x, w1, b1, w2, b2, gelu=True):
    h = x @ w1.T + b1
    if gelu:
        h = 0.5 * h * (1.0 + jax.lax.erf(h * (1.0 / jnp.sqrt(2.0))))
    else:
        h = jnp.maximum(h, 0.0)
    return h @ w2.T + b2


if __name__ == "__main__":
    # Small shapes consistent with (..., input_dim)
    batch, seq, input_dim, inner_dim = 2, 8, 32, 64

    key = jax.random.PRNGKey(0)
    kx, kw1, kb1, kw2, kb2, kx2, kx3 = jax.random.split(key, 7)

    x = jax.random.normal(kx, (batch, seq, input_dim), dtype=jnp.float32)

    # nn.Linear shapes: weight (out, in), bias (out,)
    w1 = jax.random.normal(kw1, (inner_dim, input_dim), dtype=jnp.float32) * 0.05
    b1 = jax.random.normal(kb1, (inner_dim,), dtype=jnp.float32) * 0.05
    w2 = jax.random.normal(kw2, (input_dim, inner_dim), dtype=jnp.float32) * 0.05
    b2 = jax.random.normal(kb2, (input_dim,), dtype=jnp.float32) * 0.05

    # ---- 1) f32 weights, column-padded path (input_dim=32 < 128) ----------
    params = prepare_ffn_params(w1, b1, w2, b2)           # one-time prep
    out = jax.block_until_ready(feed_forward(x, params))
    ref = feed_forward_ref(x, w1, b1, w2, b2)
    assert out.shape == x.shape
    assert jnp.allclose(out, ref, atol=1e-5, rtol=1e-5), "mismatch vs reference"

    # ReLU variant
    out_r = jax.block_until_ready(feed_forward(x, params, gelu=False))
    ref_r = feed_forward_ref(x, w1, b1, w2, b2, gelu=False)
    assert jnp.allclose(out_r, ref_r, atol=1e-5, rtol=1e-5), "mismatch (ReLU)"

    # Ragged token count (exercises partial row blocks on the padded-d_in path)
    x2 = jax.random.normal(kx2, (3, 5, input_dim), dtype=jnp.float32)
    out2 = jax.block_until_ready(feed_forward(x2, params))
    ref2 = feed_forward_ref(x2, w1, b1, w2, b2)
    assert out2.shape == x2.shape
    assert jnp.allclose(out2, ref2, atol=1e-5, rtol=1e-5), "mismatch (ragged M)"

    # ---- 2) lane-aligned d_in + ragged M: no pad / no slice fast path ------
    d_al, inner_al = 128, 256
    w1a = jax.random.normal(kw1, (inner_al, d_al), dtype=jnp.float32) * 0.05
    b1a = jax.random.normal(kb1, (inner_al,), dtype=jnp.float32) * 0.05
    w2a = jax.random.normal(kw2, (d_al, inner_al), dtype=jnp.float32) * 0.05
    b2a = jax.random.normal(kb2, (d_al,), dtype=jnp.float32) * 0.05
    params_a = prepare_ffn_params(w1a, b1a, w2a, b2a)
    x3 = jax.random.normal(kx3, (3, 5, d_al), dtype=jnp.float32)   # m=15 (ragged)
    out3 = jax.block_until_ready(feed_forward(x3, params_a))
    ref3 = feed_forward_ref(x3, w1a, b1a, w2a, b2a)
    assert out3.shape == x3.shape
    assert jnp.allclose(out3, ref3, atol=1e-4, rtol=1e-4), "mismatch (aligned d_in)"

    # ---- 3) bf16 weights (bf16-native MXU path), f32 activations -----------
    params_bf16 = prepare_ffn_params(w1, b1, w2, b2, weights_dtype=jnp.bfloat16)
    out_b = jax.block_until_ready(feed_forward(x, params_bf16))
    assert jnp.allclose(out_b, ref, atol=2e-2, rtol=2e-2), "mismatch (bf16 weights)"

    # ---- 4) bf16 activations + bf16 weights (scratch-accumulator path) -----
    x_bf16 = x.astype(jnp.bfloat16)
    out_bb = jax.block_until_ready(feed_forward(x_bf16, params_bf16))
    assert out_bb.dtype == jnp.bfloat16
    assert jnp.allclose(out_bb.astype(jnp.float32), ref, atol=3e-2, rtol=3e-2), \
        "mismatch (bf16 x)"

    print("KERNEL_OK")
</pallas_src>

<mosaic_0001>
module attributes {stable_mosaic.version = 11 : i64} {
  func.func @_ffn_kernel(%arg0: i32, %arg1: i32, %arg2: memref<16x128xf32, #tpu.memory_space<vmem>>, %arg3: memref<128x128xf32, #tpu.memory_space<vmem>>, %arg4: memref<1x128xf32, #tpu.memory_space<vmem>>, %arg5: memref<128x128xf32, #tpu.memory_space<vmem>>, %arg6: memref<1x128xf32, #tpu.memory_space<vmem>>, %arg7: memref<16x128xf32, #tpu.memory_space<vmem>>) attributes {dimension_semantics = [#tpu.dimension_semantics<parallel>, #tpu.dimension_semantics<arbitrary>], iteration_bounds = array<i64: 1, 1>, scalar_prefetch = 0 : i64, scratch_operands = 0 : i64, tpu.core_type = #tpu.core_type<tc>, window_params = [{transform_indices = @transform_0, window_bounds = array<i64: 16, 128>}, {transform_indices = @transform_1, window_bounds = array<i64: 128, 128>}, {transform_indices = @transform_2, window_bounds = array<i64: 1, 128>}, {transform_indices = @transform_3, window_bounds = array<i64: 128, 128>}, {pipeline_mode = #tpu.pipeline_mode<synchronous>, transform_indices = @transform_4, window_bounds = array<i64: 1, 128>}, {transform_indices = @transform_5, window_bounds = array<i64: 16, 128>}]} {
    %c0_i32 = arith.constant 0 : i32
    %0 = arith.cmpi eq, %arg1, %c0_i32 : i32
    %1 = arith.extui %0 : i1 to i32
    %c0_i32_0 = arith.constant 0 : i32
    %2 = arith.cmpi ne, %1, %c0_i32_0 : i32
    scf.if %2 {
      %c0_16 = arith.constant 0 : index
      %c0_17 = arith.constant 0 : index
      %22 = vector.load %arg6[%c0_16, %c0_17] : memref<1x128xf32, #tpu.memory_space<vmem>>, vector<1x128xf32>
      %23 = vector.shape_cast %22 : vector<1x128xf32> to vector<1x128xf32>
      %24 = vector.broadcast %23 : vector<1x128xf32> to vector<16x128xf32>
      %c0_18 = arith.constant 0 : index
      %c0_19 = arith.constant 0 : index
      %25 = vector.load %arg7[%c0_18, %c0_19] : memref<16x128xf32, #tpu.memory_space<vmem>>, vector<16x128xf32>
      tpu.vector_store %arg7[%c0_18, %c0_19], %24 {strides = array<i32>} : memref<16x128xf32, #tpu.memory_space<vmem>>, vector<16x128xf32>,
    } else {
    }
    %c0 = arith.constant 0 : index
    %c0_1 = arith.constant 0 : index
    %3 = vector.load %arg2[%c0, %c0_1] : memref<16x128xf32, #tpu.memory_space<vmem>>, vector<16x128xf32>
    %c0_2 = arith.constant 0 : index
    %c0_3 = arith.constant 0 : index
    %4 = vector.load %arg3[%c0_2, %c0_3] : memref<128x128xf32, #tpu.memory_space<vmem>>, vector<128x128xf32>
    %cst = arith.constant dense<0.000000e+00> : vector<16x128xf32>
    %5 = tpu.matmul %3, %4, %cst {dimension_numbers = #tpu.dot_dimension_numbers<[1], [0], [0], [1], [0, 0, 1, 1], [], []>} : vector<16x128xf32>, vector<128x128xf32>, vector<16x128xf32> -> vector<16x128xf32>
    %c0_4 = arith.constant 0 : index
    %c0_5 = arith.constant 0 : index
    %6 = vector.load %arg4[%c0_4, %c0_5] : memref<1x128xf32, #tpu.memory_space<vmem>>, vector<1x128xf32>
    %7 = vector.broadcast %6 : vector<1x128xf32> to vector<16x128xf32>
    %8 = arith.addf %5, %7 : vector<16x128xf32>
    %cst_6 = arith.constant 5.000000e-01 : f32
    %9 = vector.broadcast %cst_6 : f32 to vector<16x128xf32>
    %10 = arith.mulf %9, %8 : vector<16x128xf32>
    %cst_7 = arith.constant 0.707106769 : f32
    %11 = vector.broadcast %cst_7 : f32 to vector<16x128xf32>
    %12 = arith.mulf %8, %11 : vector<16x128xf32>
    %13 = math.erf %12 : vector<16x128xf32>
    %cst_8 = arith.constant 1.000000e+00 : f32
    %14 = vector.broadcast %cst_8 : f32 to vector<16x128xf32>
    %15 = arith.addf %14, %13 : vector<16x128xf32>
    %16 = arith.mulf %10, %15 : vector<16x128xf32>
    %c0_9 = arith.constant 0 : index
    %c0_10 = arith.constant 0 : index
    %17 = vector.load %arg7[%c0_9, %c0_10] : memref<16x128xf32, #tpu.memory_space<vmem>>, vector<16x128xf32>
    %c0_11 = arith.constant 0 : index
    %c0_12 = arith.constant 0 : index
    %18 = vector.load %arg5[%c0_11, %c0_12] : memref<128x128xf32, #tpu.memory_space<vmem>>, vector<128x128xf32>
    %cst_13 = arith.constant dense<0.000000e+00> : vector<16x128xf32>
    %19 = tpu.matmul %16, %18, %cst_13 {dimension_numbers = #tpu.dot_dimension_numbers<[1], [0], [0], [1], [0, 0, 1, 1], [], []>} : vector<16x128xf32>, vector<128x128xf32>, vector<16x128xf32> -> vector<16x128xf32>
    %20 = arith.addf %17, %19 : vector<16x128xf32>
    %c0_14 = arith.constant 0 : index
    %c0_15 = arith.constant 0 : index
    %21 = vector.load %arg7[%c0_14, %c0_15] : memref<16x128xf32, #tpu.memory_space<vmem>>, vector<16x128xf32>
    tpu.vector_store %arg7[%c0_14, %c0_15], %20 {strides = array<i32>} : memref<16x128xf32, #tpu.memory_space<vmem>>, vector<16x128xf32>,
    return
  }
  func.func @transform_0(%arg0: i32, %arg1: i32) -> (i32, i32) {
    %c0_i32 = arith.constant 0 : i32
    %c0_i32_0 = arith.constant 0 : i32
    return %arg0, %c0_i32 : i32, i32
  }
  func.func @transform_1(%arg0: i32, %arg1: i32) -> (i32, i32) {
    %c0_i32 = arith.constant 0 : i32
    %c0_i32_0 = arith.constant 0 : i32
    return %c0_i32, %arg1 : i32, i32
  }
  func.func @transform_2(%arg0: i32, %arg1: i32) -> (i32, i32) {
    %c0_i32 = arith.constant 0 : i32
    %c0_i32_0 = arith.constant 0 : i32
    return %c0_i32, %arg1 : i32, i32
  }
  func.func @transform_3(%arg0: i32, %arg1: i32) -> (i32, i32) {
    %c0_i32 = arith.constant 0 : i32
    %c0_i32_0 = arith.constant 0 : i32
    return %arg1, %c0_i32 : i32, i32
  }
  func.func @transform_4(%arg0: i32, %arg1: i32) -> (i32, i32) {
    %c0_i32 = arith.constant 0 : i32
    %c0_i32_0 = arith.constant 0 : i32
    %c0_i32_1 = arith.constant 0 : i32
    return %c0_i32, %c0_i32_0 : i32, i32
  }
  func.func @transform_5(%arg0: i32, %arg1: i32) -> (i32, i32) {
    %c0_i32 = arith.constant 0 : i32
    %c0_i32_0 = arith.constant 0 : i32
    return %arg0, %c0_i32 : i32, i32
  }
}

</mosaic_0001>

<llo_original>
// kernel: _ffn_2d.1
$region0: #{_ffn_2d.1}
  #allocation0 [shape = 'u32[]', space=smem, size = 0x4, offset = 0x4, fixed_abs, tag = 'smem constant byte address 0x4 - core index']
  #allocation1 [shape = 'u32[144,128]{1,0:T(1,128)}', space=vmem, size = 0x12000, scoped, tag = 'internal scratch']
  %s0 = inlined_call_operand.vmem [shape: f32[16,128], index: 0, kind: input, shape index: {}]
  %s1 = inlined_call_operand.hbm [shape: f32[128,128], index: 1, kind: input, shape index: {}]
  %s2 = inlined_call_operand.vmem [shape: f32[1,128], index: 2, kind: input, shape index: {}]
  %s3 = inlined_call_operand.hbm [shape: f32[128,128], index: 3, kind: input, shape index: {}]
  %s4 = inlined_call_operand.vmem [shape: f32[1,128], index: 4, kind: input, shape index: {}]
  %s5 = inlined_call_operand.hbm [shape: f32[16,128], index: 5, kind: output, shape index: {}]
  %s6 = sld [smem:[#allocation0]]
  $region42: #{_ffn_2d.1} parent=0
    _
  %s8 = ssub.s32 1, %s6
  %s9 = scalar_select 0, %s8, %s6
  $region1: #{_ffn_2d.1} parent=0
    #allocation2 [shape = 'u8[65536]{0}', space=vmem, size = 0x10000, scoped, tag = 'input window, operand 1, single buffered']
    #allocation3 [shape = 's32[1]{0}', space=sflag, size = 0x4, scoped, tag = 'scoped memory for _ffn_2d.1']
    #allocation4 [shape = 's32[1]{0}', space=sflag, size = 0x4, scoped, tag = 'scoped memory for _ffn_2d.1']
    #allocation5 [shape = 'u8[65536]{0}', space=vmem, size = 0x10000, scoped, tag = 'input window, operand 3, single buffered']
    #allocation6 [shape = 's32[1]{0}', space=sflag, size = 0x4, scoped, tag = 'scoped memory for _ffn_2d.1']
    #allocation7 [shape = 'u8[8192]{0}', space=vmem, size = 0x2000, scoped, tag = 'output window, operand 0, single buffered']
    %10 = vsyncpa [#allocation3], 0
    %11 = vsyncpa [#allocation6], 0
    %12 = vsyncpa [#allocation4], 0
    // Predicated region
    $region2: #{_ffn_2d.1} parent=1 // pred_check
      _
    $region3: #{_ffn_2d.1} parent=1 // pred_check_branch
      %14 = sbr.rel (0) target = $region5
    $region4: #{_ffn_2d.1} parent=1 // pred_region
      _
    $region5: #{_ffn_2d.1} parent=1 // pred_fallthru
      _
    // Predicated region
    $region6: #{_ffn_2d.1} parent=1 // pred_check
      _
    $region7: #{_ffn_2d.1} parent=1 // pred_check_branch
      %16 = sbr.rel (0) target = $region9
    $region8: #{_ffn_2d.1} parent=1 // pred_region
      %s18 = ssub.s32 2048, 2048
      %19 = vsyncadd [#allocation3], %s18
      %s20 = sshll.u32 [#allocation2], 4
      %s21 = int_to_ptr.vmem [resolvable:$true] %s20
      %26 = dma.hbm_to_vmem [thread:$0]  %s1, 2048, %s21, [#allocation3], 128, 128, 8
    $region9: #{_ffn_2d.1} parent=1 // pred_fallthru
      _
    // Predicated region
    $region10: #{_ffn_2d.1} parent=1 // pred_check
      _
    $region11: #{_ffn_2d.1} parent=1 // pred_check_branch
      %28 = sbr.rel (0) target = $region13
    $region12: #{_ffn_2d.1} parent=1 // pred_region
      _
    $region13: #{_ffn_2d.1} parent=1 // pred_fallthru
      _
    // Predicated region
    $region14: #{_ffn_2d.1} parent=1 // pred_check
      _
    $region15: #{_ffn_2d.1} parent=1 // pred_check_branch
      %30 = sbr.rel (0) target = $region17
    $region16: #{_ffn_2d.1} parent=1 // pred_region
      %s32 = ssub.s32 2048, 2048
      %33 = vsyncadd [#allocation6], %s32
      %s34 = sshll.u32 [#allocation5], 4
      %s35 = int_to_ptr.vmem [resolvable:$true] %s34
      %40 = dma.hbm_to_vmem [thread:$0]  %s3, 2048, %s35, [#allocation6], 128, 128, 8
    $region17: #{_ffn_2d.1} parent=1 // pred_fallthru
      _
    // Predicated region
    $region18: #{_ffn_2d.1} parent=1 // pred_check
      _
    $region19: #{_ffn_2d.1} parent=1 // pred_check_branch
      %42 = sbr.rel (0) target = $region21
    $region20: #{_ffn_2d.1} parent=1 // pred_region
      _
    $region21: #{_ffn_2d.1} parent=1 // pred_fallthru
      _
    // Predicated region
    $region22: #{_ffn_2d.1} parent=1 // pred_check
      _
    $region23: #{_ffn_2d.1} parent=1 // pred_check_branch
      %44 = sbr.rel (0) target = $region25
    $region24: #{_ffn_2d.1} parent=1 // pred_region
      %45 = dma.done [#allocation3], 2048
    $region25: #{_ffn_2d.1} parent=1 // pred_fallthru
      _
    // Predicated region
    $region26: #{_ffn_2d.1} parent=1 // pred_check
      _
    $region27: #{_ffn_2d.1} parent=1 // pred_check_branch
      %47 = sbr.rel (0) target = $region29
    $region28: #{_ffn_2d.1} parent=1 // pred_region
      %48 = dma.done [#allocation6], 2048
    $region29: #{_ffn_2d.1} parent=1 // pred_fallthru
      _
    %p49 = scmp.eq.s32.totalorder 0, 0
    // Predicated region
    $region30: #{_ffn_2d.1} parent=1 // pred_check
      %p50 = pneg %p49
    $region31: #{_ffn_2d.1} parent=1 // pred_check_branch
      %52 = sbr.rel (%p50) target = $region33
    $region32: #{_ffn_2d.1} parent=1 // pred_region
      %v53 = vld [vmem:[%s4] sm:$0x1]
      %v55 = vlaneseq
      %v56 = vshrl.u32 %v55, 7
      %v57 = vsub.s32 0, %v56
      %v58 = vrot.slane %v53, %v57
      %60 = vst [vmem:[#allocation7] sm:$0xff] %v58
      %61 = vst [vmem:[#allocation7 + $0x8] sm:$0xff] %v58
    $region33: #{_ffn_2d.1} parent=1 // pred_fallthru
      _
    %v62 = vld [vmem:[%s0] sm:$0xff]
    %v63 = vld [vmem:[%s0 + $0x8] sm:$0xff]
    %v64 = vld [vmem:[#allocation2] sm:$0xff]
    %v65 = vld [vmem:[#allocation2 + $0x8] sm:$0xff]
    %v66 = vld [vmem:[#allocation2 + $0x10] sm:$0xff]
    %v67 = vld [vmem:[#allocation2 + $0x18] sm:$0xff]
    %v68 = vld [vmem:[#allocation2 + $0x20] sm:$0xff]
    %v69 = vld [vmem:[#allocation2 + $0x28] sm:$0xff]
    %v70 = vld [vmem:[#allocation2 + $0x30] sm:$0xff]
    %v71 = vld [vmem:[#allocation2 + $0x38] sm:$0xff]
    %v72 = vld [vmem:[#allocation2 + $0x40] sm:$0xff]
    %v73 = vld [vmem:[#allocation2 + $0x48] sm:$0xff]
    %v74 = vld [vmem:[#allocation2 + $0x50] sm:$0xff]
    %v75 = vld [vmem:[#allocation2 + $0x58] sm:$0xff]
    %v76 = vld [vmem:[#allocation2 + $0x60] sm:$0xff]
    %v77 = vld [vmem:[#allocation2 + $0x68] sm:$0xff]
    %v78 = vld [vmem:[#allocation2 + $0x70] sm:$0xff]
    %v79 = vld [vmem:[#allocation2 + $0x78] sm:$0xff]
    %v80 = vld [vmem:[%s2] sm:$0x1]
    %v82 = vlaneseq
    %v83 = vshrl.u32 %v82, 7
    %v84 = vsub.s32 0, %v83
    %v85 = vrot.slane %v80, %v84
    %87 = vmatprep.subr.mxu0 0.0
    %88 = vmatpush1.msra.mxu0 %v64
    %89 = vmatprep.subr.mxu0 0.0
    %90 = vmatpush1.msra.mxu0 %v65
    %91 = vmatprep.subr.mxu0 0.0
    %92 = vmatpush1.msra.mxu0 %v66
    %93 = vmatprep.subr.mxu0 0.0
    %94 = vmatpush1.msra.mxu0 %v67
    %95 = vmatprep.subr.mxu0 0.0
    %96 = vmatpush1.msra.mxu0 %v68
    %97 = vmatprep.subr.mxu0 0.0
    %98 = vmatpush1.msra.mxu0 %v69
    %99 = vmatprep.subr.mxu0 0.0
    %100 = vmatpush1.msra.mxu0 %v70
    %101 = vmatprep.subr.mxu0 0.0
    %102 = vmatpush1.msra.mxu0 %v71
    %103 = vmatprep.subr.mxu0 0.0
    %104 = vmatpush1.msra.mxu0 %v72
    %105 = vmatprep.subr.mxu0 0.0
    %106 = vmatpush1.msra.mxu0 %v73
    %107 = vmatprep.subr.mxu0 0.0
    %108 = vmatpush1.msra.mxu0 %v74
    %109 = vmatprep.subr.mxu0 0.0
    %110 = vmatpush1.msra.mxu0 %v75
    %111 = vmatprep.subr.mxu0 0.0
    %112 = vmatpush1.msra.mxu0 %v76
    %113 = vmatprep.subr.mxu0 0.0
    %114 = vmatpush1.msra.mxu0 %v77
    %115 = vmatprep.subr.mxu0 0.0
    %116 = vmatpush1.msra.mxu0 %v78
    %117 = vmatprep.subr.mxu0 0.0
    %118 = vmatpush1.msra.mxu0 %v79
    %119 = vmatprep.subr.mxu0 0.0
    %120 = vmatpush1.msra.mxu0 0.0
    %121 = vmatprep.subr.mxu0 0.0
    %122 = vmatpush1.msra.mxu0 0.0
    %123 = vmatprep.subr.mxu0 0.0
    %124 = vmatpush1.msra.mxu0 0.0
    %125 = vmatprep.subr.mxu0 0.0
    %126 = vmatpush1.msra.mxu0 0.0
    %127 = vmatprep.subr.mxu0 0.0
    %128 = vmatpush1.msra.mxu0 0.0
    %129 = vmatprep.subr.mxu0 0.0
    %130 = vmatpush1.msra.mxu0 0.0
    %131 = vmatprep.subr.mxu0 0.0
    %132 = vmatpush1.msra.mxu0 0.0
    %133 = vmatprep.subr.mxu0 0.0
    %134 = vmatpush1.msra.mxu0 0.0
    %135 = vmatprep.subr.mxu0 0.0
    %136 = vmatpush1.msra.mxu0 0.0
    %137 = vmatprep.subr.mxu0 0.0
    %138 = vmatpush1.msra.mxu0 0.0
    %139 = vmatprep.subr.mxu0 0.0
    %140 = vmatpush1.msra.mxu0 0.0
    %141 = vmatprep.subr.mxu0 0.0
    %142 = vmatpush1.msra.mxu0 0.0
    %143 = vmatprep.subr.mxu0 0.0
    %144 = vmatpush1.msra.mxu0 0.0
    %145 = vmatprep.subr.mxu0 0.0
    %146 = vmatpush1.msra.mxu0 0.0
    %147 = vmatprep.subr.mxu0 0.0
    %148 = vmatpush1.msra.mxu0 0.0
    %149 = vmatprep.subr.mxu0 0.0
    %150 = vmatpush1.msra.mxu0 0.0
    %151 = vmatprep.mubr.f32.mxu0 0.0
    %152 = vmatmul.mubr.f32.gmra.mrb[0].mxu0 %v62
    %v153 = vpop.f32.mrb[0].mxu0
    %v154 = vadd.f32 %v85, %v153
    %v155 = vpop.f32.mrb[0].mxu0
    %156 = vmatprep.mubr.f32.mxu0 0.0
    %157 = vmatmul.mubr.f32.gmra.mrb[0].mxu0 %v63
    %v158 = vpop.f32.mrb[0].mxu0
    %v159 = vadd.f32 %v85, %v158
    %v160 = vpop.f32.mrb[0].mxu0
    %161 = vdwg.mxu0
    %v162 = vmul.f32 %v154, 0.5
    %v163 = vmul.f32 %v159, 0.5
    %v164 = vmul.f32 %v154, 0.70710677
    %v165 = vmul.f32 %v159, 0.70710677
    %v166 = verf.f32.pop %v164
    %v167 = verf.f32.pop %v165
    %v168 = vadd.f32 %v166, 1.0
    %v169 = vadd.f32 %v167, 1.0
    %v170 = vmul.f32 %v162, %v168
    %v171 = vmul.f32 %v163, %v169
    %v172 = vld [vmem:[#allocation7] sm:$0xff]
    %v173 = vld [vmem:[#allocation7 + $0x8] sm:$0xff]
    %v174 = vld [vmem:[#allocation5] sm:$0xff]
    %v175 = vld [vmem:[#allocation5 + $0x8] sm:$0xff]
    %v176 = vld [vmem:[#allocation5 + $0x10] sm:$0xff]
    %v177 = vld [vmem:[#allocation5 + $0x18] sm:$0xff]
    %v178 = vld [vmem:[#allocation5 + $0x20] sm:$0xff]
    %v179 = vld [vmem:[#allocation5 + $0x28] sm:$0xff]
    %v180 = vld [vmem:[#allocation5 + $0x30] sm:$0xff]
    %v181 = vld [vmem:[#allocation5 + $0x38] sm:$0xff]
    %v182 = vld [vmem:[#allocation5 + $0x40] sm:$0xff]
    %v183 = vld [vmem:[#allocation5 + $0x48] sm:$0xff]
    %v184 = vld [vmem:[#allocation5 + $0x50] sm:$0xff]
    %v185 = vld [vmem:[#allocation5 + $0x58] sm:$0xff]
    %v186 = vld [vmem:[#allocation5 + $0x60] sm:$0xff]
    %v187 = vld [vmem:[#allocation5 + $0x68] sm:$0xff]
    %v188 = vld [vmem:[#allocation5 + $0x70] sm:$0xff]
    %v189 = vld [vmem:[#allocation5 + $0x78] sm:$0xff]
    %190 = vmatprep.subr.mxu0 0.0
    %191 = vmatpush1.msra.mxu0 %v174
    %192 = vmatprep.subr.mxu0 0.0
    %193 = vmatpush1.msra.mxu0 %v175
    %194 = vmatprep.subr.mxu0 0.0
    %195 = vmatpush1.msra.mxu0 %v176
    %196 = vmatprep.subr.mxu0 0.0
    %197 = vmatpush1.msra.mxu0 %v177
    %198 = vmatprep.subr.mxu0 0.0
    %199 = vmatpush1.msra.mxu0 %v178
    %200 = vmatprep.subr.mxu0 0.0
    %201 = vmatpush1.msra.mxu0 %v179
    %202 = vmatprep.subr.mxu0 0.0
    %203 = vmatpush1.msra.mxu0 %v180
    %204 = vmatprep.subr.mxu0 0.0
    %205 = vmatpush1.msra.mxu0 %v181
    %206 = vmatprep.subr.mxu0 0.0
    %207 = vmatpush1.msra.mxu0 %v182
    %208 = vmatprep.subr.mxu0 0.0
    %209 = vmatpush1.msra.mxu0 %v183
    %210 = vmatprep.subr.mxu0 0.0
    %211 = vmatpush1.msra.mxu0 %v184
    %212 = vmatprep.subr.mxu0 0.0
    %213 = vmatpush1.msra.mxu0 %v185
    %214 = vmatprep.subr.mxu0 0.0
    %215 = vmatpush1.msra.mxu0 %v186
    %216 = vmatprep.subr.mxu0 0.0
    %217 = vmatpush1.msra.mxu0 %v187
    %218 = vmatprep.subr.mxu0 0.0
    %219 = vmatpush1.msra.mxu0 %v188
    %220 = vmatprep.subr.mxu0 0.0
    %221 = vmatpush1.msra.mxu0 %v189
    %222 = vmatprep.subr.mxu0 0.0
    %223 = vmatpush1.msra.mxu0 0.0
    %224 = vmatprep.subr.mxu0 0.0
    %225 = vmatpush1.msra.mxu0 0.0
    %226 = vmatprep.subr.mxu0 0.0
    %227 = vmatpush1.msra.mxu0 0.0
    %228 = vmatprep.subr.mxu0 0.0
    %229 = vmatpush1.msra.mxu0 0.0
    %230 = vmatprep.subr.mxu0 0.0
    %231 = vmatpush1.msra.mxu0 0.0
    %232 = vmatprep.subr.mxu0 0.0
    %233 = vmatpush1.msra.mxu0 0.0
    %234 = vmatprep.subr.mxu0 0.0
    %235 = vmatpush1.msra.mxu0 0.0
    %236 = vmatprep.subr.mxu0 0.0
    %237 = vmatpush1.msra.mxu0 0.0
    %238 = vmatprep.subr.mxu0 0.0
    %239 = vmatpush1.msra.mxu0 0.0
    %240 = vmatprep.subr.mxu0 0.0
    %241 = vmatpush1.msra.mxu0 0.0
    %242 = vmatprep.subr.mxu0 0.0
    %243 = vmatpush1.msra.mxu0 0.0
    %244 = vmatprep.subr.mxu0 0.0
    %245 = vmatpush1.msra.mxu0 0.0
    %246 = vmatprep.subr.mxu0 0.0
    %247 = vmatpush1.msra.mxu0 0.0
    %248 = vmatprep.subr.mxu0 0.0
    %249 = vmatpush1.msra.mxu0 0.0
    %250 = vmatprep.subr.mxu0 0.0
    %251 = vmatpush1.msra.mxu0 0.0
    %252 = vmatprep.subr.mxu0 0.0
    %253 = vmatpush1.msra.mxu0 0.0
    %254 = vmatprep.mubr.f32.mxu0 0.0
    %255 = vmatmul.mubr.f32.gmra.mrb[0].mxu0 %v170
    %v256 = vpop.f32.mrb[0].mxu0
    %v257 = vadd.f32 0.0, %v256
    %v258 = vpop.f32.mrb[0].mxu0
    %259 = vmatprep.mubr.f32.mxu0 0.0
    %260 = vmatmul.mubr.f32.gmra.mrb[0].mxu0 %v171
    %v261 = vpop.f32.mrb[0].mxu0
    %v262 = vadd.f32 0.0, %v261
    %v263 = vpop.f32.mrb[0].mxu0
    %264 = vdwg.mxu0
    %v265 = vadd.f32 %v172, %v257
    %v266 = vadd.f32 %v173, %v262
    %267 = vst [vmem:[#allocation7] sm:$0xff] %v265
    %268 = vst [vmem:[#allocation7 + $0x8] sm:$0xff] %v266
    // Predicated region
    $region34: #{_ffn_2d.1} parent=1 // pred_check
      _
    $region35: #{_ffn_2d.1} parent=1 // pred_check_branch
      %270 = sbr.rel (0) target = $region37
    $region36: #{_ffn_2d.1} parent=1 // pred_region
      %s272 = ssub.s32 256, 256
      %273 = vsyncadd [#allocation4], %s272
      %s274 = sshll.u32 [#allocation7], 4
      %s275 = int_to_ptr.vmem [resolvable:$true] %s274
      %280 = dma.vmem_to_hbm [thread:$0]  %s275, 256, %s5, [#allocation4], 128, 128, 8
    $region37: #{_ffn_2d.1} parent=1 // pred_fallthru
      _
    // Predicated region
    $region38: #{_ffn_2d.1} parent=1 // pred_check
      _
    $region39: #{_ffn_2d.1} parent=1 // pred_check_branch
      %282 = sbr.rel (0) target = $region41
    $region40: #{_ffn_2d.1} parent=1 // pred_region
      %283 = dma.done [#allocation4], 256
    $region41: #{_ffn_2d.1} parent=1 // pred_fallthru
      _
    %284 = vsyncpa [#allocation3], 1
    %285 = vsyncpa [#allocation6], 1
    %286 = vsyncpa [#allocation4], 1

</llo_original>
